<compile_context>
chip_gen: v5e
topology: v5e:2x2
jax: 0.10.0
libtpu: 0.0.40
codegen_flags: <defaults>
</compile_context>

<pallas_src>
import jax
import jax.numpy as jnp
from jax.experimental import pallas as pl
from jax.experimental.pallas import tpu as pltpu

O_PAD = 128  # lane-dense padded fc3 output width


def _mlp_kernel(x_ref, w1_ref, b1_ref, w2_ref, b2_ref, w3_ref, b3_ref, o_ref):
    # In-kernel bf16 cast of the activation tile (x is read from HBM as f32 once).
    x = x_ref[...].astype(jnp.bfloat16)
    # fc1 + ReLU   (dropout is identity in eval mode)
    h1 = jnp.dot(x, w1_ref[...], preferred_element_type=jnp.float32)
    h1 = jnp.maximum(h1 + b1_ref[...], 0.0)
    # fc2 + ReLU   (elementwise path stays f32: v5e has no bf16 VPU/EUP)
    h2 = jnp.dot(h1.astype(jnp.bfloat16), w2_ref[...],
                 preferred_element_type=jnp.float32)
    h2 = jnp.maximum(h2 + b2_ref[...], 0.0)
    # fc3 (padded to 128 lanes) + sigmoid
    logits = jnp.dot(h2.astype(jnp.bfloat16), w3_ref[...],
                     preferred_element_type=jnp.float32)
    o_ref[...] = jax.nn.sigmoid(logits + b3_ref[...])


def _round_up(n, m):
    return ((n + m - 1) // m) * m


def init_params(key, cols, rows, channels):
    """Deterministic PyTorch-style (uniform) initialization of fc1/fc2/fc3 (f32)."""
    D = cols * rows * channels
    dims = [(D, 256), (256, 256), (256, 2)]
    params = []
    for fan_in, fan_out in dims:
        kw, kb, key = jax.random.split(key, 3)
        bound = 1.0 / jnp.sqrt(fan_in)
        w = jax.random.uniform(kw, (fan_in, fan_out), jnp.float32, -bound, bound)
        b = jax.random.uniform(kb, (1, fan_out), jnp.float32, -bound, bound)
        params.extend([w, b])
    return tuple(params)


def prepare_params(params):
    """One-time prep: bf16 weights, fc3 weight/bias zero-padded to O_PAD lanes."""
    w1, b1, w2, b2, w3, b3 = params
    O = w3.shape[1]
    w1b = w1.astype(jnp.bfloat16)
    w2b = w2.astype(jnp.bfloat16)
    w3p = jnp.pad(w3.astype(jnp.bfloat16), ((0, 0), (0, O_PAD - O)))
    b3p = jnp.pad(b3, ((0, 0), (0, O_PAD - O)))
    return (w1b, b1, w2b, b2, w3p, b3p, O)


def mlp_forward(x_nchw, prepared, *, tm=1024):
    """x_nchw: (B, C, H, W) float32. Returns (B, 2) sigmoid probabilities."""
    w1b, b1, w2b, b2, w3p, b3p, O = prepared
    B = x_nchw.shape[0]
    # Same flatten order as torch.nn.Flatten on contiguous NCHW; stays f32.
    x = x_nchw.reshape(B, -1)
    D = x.shape[1]
    H = w1b.shape[1]  # 256

    # Batch tile: multiple of 16 (bf16 sublane packing), capped at tm.
    tile_m = min(tm, _round_up(B, 16))
    if B > 16:
        # Keep >= 2 parallel grid steps so a 2-TC chip (v7x) uses both cores.
        tile_m = min(tile_m, _round_up(-(-B // 2), 16))

    # Conservative VMEM guard (resident weights + double-buffered x/out tiles).
    weight_bytes = (D * H + H * H + H * O_PAD) * 2 + (2 * H + O_PAD) * 4
    while tile_m > 16 and (weight_bytes
                           + 2 * tile_m * D * 4          # x tile, double-buffered
                           + 2 * tile_m * O_PAD * 4      # out tile, double-buffered
                           + tile_m * (D * 2 + 4 * H + 2 * H + 2 * O_PAD * 4)
                           ) > 40 * 1024 * 1024:
        tile_m //= 2
        tile_m = _round_up(tile_m, 16)

    Bp = _round_up(B, tile_m)
    if Bp != B:
        x = jnp.pad(x, ((0, Bp - B), (0, 0)))
    grid = (Bp // tile_m,)

    # Weights/biases: full block, constant index_map, single-buffered (resident).
    def resident(shape):
        return pl.BlockSpec(shape, lambda i: (0,) * len(shape),
                            pipeline_mode=pl.Buffered(1))

    cost = pl.CostEstimate(
        flops=2 * Bp * (D * H + H * H + H * O_PAD),
        transcendentals=Bp * O_PAD,
        bytes_accessed=(Bp * D * 4                       # x (f32)
                        + (D * H + H * H + H * O_PAD) * 2  # bf16 weights
                        + (2 * H + O_PAD) * 4            # f32 biases
                        + Bp * O_PAD * 4),               # f32 output
    )

    out = pl.pallas_call(
        _mlp_kernel,
        out_shape=jax.ShapeDtypeStruct((Bp, O_PAD), jnp.float32),
        grid=grid,
        in_specs=[
            pl.BlockSpec((tile_m, D), lambda i: (i, 0)),   # x row tile (pipelined)
            resident((D, H)), resident((1, H)),            # fc1
            resident((H, H)), resident((1, H)),            # fc2
            resident((H, O_PAD)), resident((1, O_PAD)),    # fc3 (lane-padded)
        ],
        out_specs=pl.BlockSpec((tile_m, O_PAD), lambda i: (i, 0)),
        compiler_params=pltpu.CompilerParams(
            dimension_semantics=("parallel",),
            vmem_limit_bytes=40 * 1024 * 1024),
        cost_estimate=cost,
    )(x, w1b, b1, w2b, b2, w3p, b3p)
    return out[:B, :O]


def _ref_forward(x_nchw, params):
    """Pure-JAX f32 reference of the PyTorch forward (eval mode)."""
    w1, b1, w2, b2, w3, b3 = params
    x = x_nchw.reshape(x_nchw.shape[0], -1)
    h1 = jnp.maximum(x @ w1 + b1, 0.0)
    h2 = jnp.maximum(h1 @ w2 + b2, 0.0)
    return jax.nn.sigmoid(h2 @ w3 + b3)


if __name__ == "__main__":
    # Small, module-consistent shapes: batch=2, channels=4, spatial=16x16.
    B, C, Hs, Ws = 2, 4, 16, 16
    key = jax.random.PRNGKey(0)
    kx, kp = jax.random.split(key)
    x = jax.random.normal(kx, (B, C, Hs, Ws), jnp.float32)
    params = init_params(kp, cols=Ws, rows=Hs, channels=C)
    prepared = prepare_params(params)   # one-time bf16 cast + fc3 lane padding

    # TODO(synk): training-mode dropout (p=0.5) not implemented; forward is eval-mode.
    out = jax.block_until_ready(mlp_forward(x, prepared))
    assert out.shape == (B, 2) and out.dtype == jnp.float32
    assert bool(jnp.all((out >= 0.0) & (out <= 1.0)))

    ref = jax.block_until_ready(_ref_forward(x, params))
    assert bool(jnp.allclose(out, ref, atol=5e-2)), "mismatch vs f32 reference"

    print("KERNEL_OK")
</pallas_src>

<mosaic_0001>
module attributes {stable_mosaic.version = 11 : i64} {
  func.func @_mlp_kernel(%arg0: i32, %arg1: memref<16x1024xf32, #tpu.memory_space<vmem>>, %arg2: memref<1024x256xbf16, #tpu.memory_space<vmem>>, %arg3: memref<1x256xf32, #tpu.memory_space<vmem>>, %arg4: memref<256x256xbf16, #tpu.memory_space<vmem>>, %arg5: memref<1x256xf32, #tpu.memory_space<vmem>>, %arg6: memref<256x128xbf16, #tpu.memory_space<vmem>>, %arg7: memref<1x128xf32, #tpu.memory_space<vmem>>, %arg8: memref<16x128xf32, #tpu.memory_space<vmem>>) attributes {dimension_semantics = [#tpu.dimension_semantics<parallel>], iteration_bounds = array<i64: 1>, scalar_prefetch = 0 : i64, scratch_operands = 0 : i64, tpu.core_type = #tpu.core_type<tc>, window_params = [{transform_indices = @transform_0, window_bounds = array<i64: 16, 1024>}, {pipeline_mode = #tpu.pipeline_mode<synchronous>, transform_indices = @transform_1, window_bounds = array<i64: 1024, 256>}, {pipeline_mode = #tpu.pipeline_mode<synchronous>, transform_indices = @transform_2, window_bounds = array<i64: 1, 256>}, {pipeline_mode = #tpu.pipeline_mode<synchronous>, transform_indices = @transform_3, window_bounds = array<i64: 256, 256>}, {pipeline_mode = #tpu.pipeline_mode<synchronous>, transform_indices = @transform_4, window_bounds = array<i64: 1, 256>}, {pipeline_mode = #tpu.pipeline_mode<synchronous>, transform_indices = @transform_5, window_bounds = array<i64: 256, 128>}, {pipeline_mode = #tpu.pipeline_mode<synchronous>, transform_indices = @transform_6, window_bounds = array<i64: 1, 128>}, {transform_indices = @transform_7, window_bounds = array<i64: 16, 128>}]} {
    %c0 = arith.constant 0 : index
    %c0_0 = arith.constant 0 : index
    %0 = vector.load %arg1[%c0, %c0_0] : memref<16x1024xf32, #tpu.memory_space<vmem>>, vector<16x1024xf32>
    %1 = arith.truncf %0 : vector<16x1024xf32> to vector<16x1024xbf16>
    %c0_1 = arith.constant 0 : index
    %c0_2 = arith.constant 0 : index
    %2 = vector.load %arg2[%c0_1, %c0_2] : memref<1024x256xbf16, #tpu.memory_space<vmem>>, vector<1024x256xbf16>
    %cst = arith.constant dense<0.000000e+00> : vector<16x256xf32>
    %3 = tpu.matmul %1, %2, %cst {dimension_numbers = #tpu.dot_dimension_numbers<[1], [0], [0], [1], [0, 0, 1, 1], [], []>} : vector<16x1024xbf16>, vector<1024x256xbf16>, vector<16x256xf32> -> vector<16x256xf32>
    %c0_3 = arith.constant 0 : index
    %c0_4 = arith.constant 0 : index
    %4 = vector.load %arg3[%c0_3, %c0_4] : memref<1x256xf32, #tpu.memory_space<vmem>>, vector<1x256xf32>
    %5 = vector.broadcast %4 : vector<1x256xf32> to vector<16x256xf32>
    %6 = arith.addf %3, %5 : vector<16x256xf32>
    %cst_5 = arith.constant 0.000000e+00 : f32
    %7 = vector.broadcast %cst_5 : f32 to vector<16x256xf32>
    %8 = arith.maximumf %6, %7 : vector<16x256xf32>
    %9 = arith.truncf %8 : vector<16x256xf32> to vector<16x256xbf16>
    %c0_6 = arith.constant 0 : index
    %c0_7 = arith.constant 0 : index
    %10 = vector.load %arg4[%c0_6, %c0_7] : memref<256x256xbf16, #tpu.memory_space<vmem>>, vector<256x256xbf16>
    %cst_8 = arith.constant dense<0.000000e+00> : vector<16x256xf32>
    %11 = tpu.matmul %9, %10, %cst_8 {dimension_numbers = #tpu.dot_dimension_numbers<[1], [0], [0], [1], [0, 0, 1, 1], [], []>} : vector<16x256xbf16>, vector<256x256xbf16>, vector<16x256xf32> -> vector<16x256xf32>
    %c0_9 = arith.constant 0 : index
    %c0_10 = arith.constant 0 : index
    %12 = vector.load %arg5[%c0_9, %c0_10] : memref<1x256xf32, #tpu.memory_space<vmem>>, vector<1x256xf32>
    %13 = vector.broadcast %12 : vector<1x256xf32> to vector<16x256xf32>
    %14 = arith.addf %11, %13 : vector<16x256xf32>
    %cst_11 = arith.constant 0.000000e+00 : f32
    %15 = vector.broadcast %cst_11 : f32 to vector<16x256xf32>
    %16 = arith.maximumf %14, %15 : vector<16x256xf32>
    %17 = arith.truncf %16 : vector<16x256xf32> to vector<16x256xbf16>
    %c0_12 = arith.constant 0 : index
    %c0_13 = arith.constant 0 : index
    %18 = vector.load %arg6[%c0_12, %c0_13] : memref<256x128xbf16, #tpu.memory_space<vmem>>, vector<256x128xbf16>
    %cst_14 = arith.constant dense<0.000000e+00> : vector<16x128xf32>
    %19 = tpu.matmul %17, %18, %cst_14 {dimension_numbers = #tpu.dot_dimension_numbers<[1], [0], [0], [1], [0, 0, 1, 1], [], []>} : vector<16x256xbf16>, vector<256x128xbf16>, vector<16x128xf32> -> vector<16x128xf32>
    %c0_15 = arith.constant 0 : index
    %c0_16 = arith.constant 0 : index
    %20 = vector.load %arg7[%c0_15, %c0_16] : memref<1x128xf32, #tpu.memory_space<vmem>>, vector<1x128xf32>
    %21 = vector.broadcast %20 : vector<1x128xf32> to vector<16x128xf32>
    %22 = arith.addf %19, %21 : vector<16x128xf32>
    %23 = arith.negf %22 : vector<16x128xf32>
    %24 = math.exp %23 : vector<16x128xf32>
    %cst_17 = arith.constant 1.000000e+00 : f32
    %25 = vector.broadcast %cst_17 : f32 to vector<16x128xf32>
    %26 = arith.addf %25, %24 : vector<16x128xf32>
    %27 = arith.divf %25, %26 : vector<16x128xf32>
    %c0_18 = arith.constant 0 : index
    %c0_19 = arith.constant 0 : index
    %28 = vector.load %arg8[%c0_18, %c0_19] : memref<16x128xf32, #tpu.memory_space<vmem>>, vector<16x128xf32>
    tpu.vector_store %arg8[%c0_18, %c0_19], %27 {strides = array<i32>} : memref<16x128xf32, #tpu.memory_space<vmem>>, vector<16x128xf32>,
    return
  }
  func.func @transform_0(%arg0: i32) -> (i32, i32) {
    %c0_i32 = arith.constant 0 : i32
    %c0_i32_0 = arith.constant 0 : i32
    return %arg0, %c0_i32 : i32, i32
  }
  func.func @transform_1(%arg0: i32) -> (i32, i32) {
    %c0_i32 = arith.constant 0 : i32
    %c0_i32_0 = arith.constant 0 : i32
    %c0_i32_1 = arith.constant 0 : i32
    return %c0_i32, %c0_i32_0 : i32, i32
  }
  func.func @transform_2(%arg0: i32) -> (i32, i32) {
    %c0_i32 = arith.constant 0 : i32
    %c0_i32_0 = arith.constant 0 : i32
    %c0_i32_1 = arith.constant 0 : i32
    return %c0_i32, %c0_i32_0 : i32, i32
  }
  func.func @transform_3(%arg0: i32) -> (i32, i32) {
    %c0_i32 = arith.constant 0 : i32
    %c0_i32_0 = arith.constant 0 : i32
    %c0_i32_1 = arith.constant 0 : i32
    return %c0_i32, %c0_i32_0 : i32, i32
  }
  func.func @transform_4(%arg0: i32) -> (i32, i32) {
    %c0_i32 = arith.constant 0 : i32
    %c0_i32_0 = arith.constant 0 : i32
    %c0_i32_1 = arith.constant 0 : i32
    return %c0_i32, %c0_i32_0 : i32, i32
  }
  func.func @transform_5(%arg0: i32) -> (i32, i32) {
    %c0_i32 = arith.constant 0 : i32
    %c0_i32_0 = arith.constant 0 : i32
    %c0_i32_1 = arith.constant 0 : i32
    return %c0_i32, %c0_i32_0 : i32, i32
  }
  func.func @transform_6(%arg0: i32) -> (i32, i32) {
    %c0_i32 = arith.constant 0 : i32
    %c0_i32_0 = arith.constant 0 : i32
    %c0_i32_1 = arith.constant 0 : i32
    return %c0_i32, %c0_i32_0 : i32, i32
  }
  func.func @transform_7(%arg0: i32) -> (i32, i32) {
    %c0_i32 = arith.constant 0 : i32
    %c0_i32_0 = arith.constant 0 : i32
    return %arg0, %c0_i32 : i32, i32
  }
}

</mosaic_0001>

<llo_original>
// kernel: tpu_custom_call.1
$region0: #{tpu_custom_call.1}
  #allocation0 [shape = 'u32[]', space=smem, size = 0x4, offset = 0x4, fixed_abs, tag = 'smem constant byte address 0x4 - core index']
  #allocation1 [shape = 'u32[72,128]{1,0:T(1,128)}', space=vmem, size = 0x9000, scoped, tag = 'internal scratch']
  %s0 = inlined_call_operand.hbm [shape: f32[16,1024], index: 0, kind: input, shape index: {}]
  %s1 = inlined_call_operand.hbm [shape: bf16[1024,256], index: 1, kind: input, shape index: {}]
  %s2 = inlined_call_operand.hbm [shape: f32[1,256], index: 2, kind: input, shape index: {}]
  %s3 = inlined_call_operand.hbm [shape: bf16[256,256], index: 3, kind: input, shape index: {}]
  %s4 = inlined_call_operand.vmem [shape: f32[1,256], index: 4, kind: input, shape index: {}]
  %s5 = inlined_call_operand.hbm [shape: bf16[256,128], index: 5, kind: input, shape index: {}]
  %s6 = inlined_call_operand.vmem [shape: f32[1,128], index: 6, kind: input, shape index: {}]
  %s7 = inlined_call_operand.hbm [shape: f32[16,128], index: 7, kind: output, shape index: {}]
  %s8 = sld [smem:[#allocation0]]
  $region58: #{tpu_custom_call.1} parent=0
    _
  %s10 = ssub.s32 1, %s8
  %s11 = scalar_select 0, %s10, %s8
  $region1: #{tpu_custom_call.1} parent=0
    #allocation2 [shape = 'u8[65536]{0}', space=vmem, size = 0x10000, scoped, tag = 'input window, operand 0, single buffered']
    #allocation3 [shape = 's32[1]{0}', space=sflag, size = 0x4, scoped, tag = 'scoped memory for tpu_custom_call.1']
    #allocation4 [shape = 's32[1]{0}', space=sflag, size = 0x4, scoped, tag = 'scoped memory for tpu_custom_call.1']
    #allocation5 [shape = 'u8[524288]{0}', space=vmem, size = 0x80000, scoped, tag = 'input window, operand 1, single buffered']
    #allocation6 [shape = 's32[1]{0}', space=sflag, size = 0x4, scoped, tag = 'scoped memory for tpu_custom_call.1']
    #allocation7 [shape = 'u8[1024]{0}', space=vmem, size = 0x400, scoped, tag = 'input window, operand 2, single buffered']
    #allocation8 [shape = 'u8[131072]{0}', space=vmem, size = 0x20000, scoped, tag = 'input window, operand 3, single buffered']
    #allocation9 [shape = 's32[1]{0}', space=sflag, size = 0x4, scoped, tag = 'scoped memory for tpu_custom_call.1']
    #allocation10 [shape = 'u8[65536]{0}', space=vmem, size = 0x10000, scoped, tag = 'input window, operand 5, single buffered']
    #allocation11 [shape = 'u8[8192]{0}', space=vmem, size = 0x2000, scoped, tag = 'output window, operand 0, single buffered']
    %12 = vsyncpa [#allocation3], 0
    %13 = vsyncpa [#allocation6], 0
    %14 = vsyncpa [#allocation9], 0
    %15 = vsyncpa [#allocation4], 0
    // Predicated region
    $region2: #{tpu_custom_call.1} parent=1 // pred_check
      _
    $region3: #{tpu_custom_call.1} parent=1 // pred_check_branch
      %17 = sbr.rel (0) target = $region5
    $region4: #{tpu_custom_call.1} parent=1 // pred_region
      %19 = vsyncadd [#allocation3], 0
      %s20 = sshll.u32 %s0, 4
      %s21 = int_to_ptr.hbm [resolvable:$true] %s20
      %s22 = sshll.u32 [#allocation2], 4
      %s23 = int_to_ptr.vmem [resolvable:$true] %s22
      %28 = dma.hbm_to_vmem [thread:$0]  %s21, 2048, %s23, [#allocation3], 1024, 1024, 64
    $region5: #{tpu_custom_call.1} parent=1 // pred_fallthru
      _
    // Predicated region
    $region6: #{tpu_custom_call.1} parent=1 // pred_check
      _
    $region7: #{tpu_custom_call.1} parent=1 // pred_check_branch
      %30 = sbr.rel (0) target = $region9
    $region8: #{tpu_custom_call.1} parent=1 // pred_region
      %32 = vsyncadd [#allocation6], 0
      %s33 = sshll.u32 %s1, 4
      %s34 = int_to_ptr.hbm [resolvable:$true] %s33
      %s35 = sshll.u32 [#allocation5], 4
      %s36 = int_to_ptr.vmem [resolvable:$true] %s35
      %41 = dma.hbm_to_vmem [thread:$0]  %s34, 16384, %s36, [#allocation6], 128, 128, 8
    $region9: #{tpu_custom_call.1} parent=1 // pred_fallthru
      _
    // Predicated region
    $region10: #{tpu_custom_call.1} parent=1 // pred_check
      _
    $region11: #{tpu_custom_call.1} parent=1 // pred_check_branch
      %43 = sbr.rel (0) target = $region13
    $region12: #{tpu_custom_call.1} parent=1 // pred_region
      %45 = vsyncadd [#allocation6], 0
      %s47 = sshll.u32 %s2, 4
      %s48 = int_to_ptr.hbm [resolvable:$true] %s47
      %s49 = sshll.u32 [#allocation7], 4
      %s50 = int_to_ptr.vmem [resolvable:$true] %s49
      %52 = dma.hbm_to_vmem [thread:$0]  %s48, 32, %s50, [#allocation6]
    $region13: #{tpu_custom_call.1} parent=1 // pred_fallthru
      _
    // Predicated region
    $region14: #{tpu_custom_call.1} parent=1 // pred_check
      _
    $region15: #{tpu_custom_call.1} parent=1 // pred_check_branch
      %54 = sbr.rel (0) target = $region17
    $region16: #{tpu_custom_call.1} parent=1 // pred_region
      %56 = vsyncadd [#allocation9], 0
      %s57 = sshll.u32 %s3, 4
      %s58 = int_to_ptr.hbm [resolvable:$true] %s57
      %s59 = sshll.u32 [#allocation8], 4
      %s60 = int_to_ptr.vmem [resolvable:$true] %s59
      %65 = dma.hbm_to_vmem [thread:$0]  %s58, 4096, %s60, [#allocation9], 128, 128, 8
    $region17: #{tpu_custom_call.1} parent=1 // pred_fallthru
      _
    // Predicated region
    $region18: #{tpu_custom_call.1} parent=1 // pred_check
      _
    $region19: #{tpu_custom_call.1} parent=1 // pred_check_branch
      %67 = sbr.rel (0) target = $region21
    $region20: #{tpu_custom_call.1} parent=1 // pred_region
      _
    $region21: #{tpu_custom_call.1} parent=1 // pred_fallthru
      _
    // Predicated region
    $region22: #{tpu_custom_call.1} parent=1 // pred_check
      _
    $region23: #{tpu_custom_call.1} parent=1 // pred_check_branch
      %69 = sbr.rel (0) target = $region25
    $region24: #{tpu_custom_call.1} parent=1 // pred_region
      %71 = vsyncadd [#allocation9], 0
      %s72 = sshll.u32 %s5, 4
      %s73 = int_to_ptr.hbm [resolvable:$true] %s72
      %s74 = sshll.u32 [#allocation10], 4
      %s75 = int_to_ptr.vmem [resolvable:$true] %s74
      %80 = dma.hbm_to_vmem [thread:$0]  %s73, 2048, %s75, [#allocation9], 64, 64, 4
    $region25: #{tpu_custom_call.1} parent=1 // pred_fallthru
      _
    // Predicated region
    $region26: #{tpu_custom_call.1} parent=1 // pred_check
      _
    $region27: #{tpu_custom_call.1} parent=1 // pred_check_branch
      %82 = sbr.rel (0) target = $region29
    $region28: #{tpu_custom_call.1} parent=1 // pred_region
      _
    $region29: #{tpu_custom_call.1} parent=1 // pred_fallthru
      _
    // Predicated region
    $region30: #{tpu_custom_call.1} parent=1 // pred_check
      _
    $region31: #{tpu_custom_call.1} parent=1 // pred_check_branch
      %84 = sbr.rel (0) target = $region33
    $region32: #{tpu_custom_call.1} parent=1 // pred_region
      %86 = dma.done [#allocation3], 2048
    $region33: #{tpu_custom_call.1} parent=1 // pred_fallthru
      _
    // Predicated region
    $region34: #{tpu_custom_call.1} parent=1 // pred_check
      _
    $region35: #{tpu_custom_call.1} parent=1 // pred_check_branch
      %88 = sbr.rel (0) target = $region37
    $region36: #{tpu_custom_call.1} parent=1 // pred_region
      %90 = dma.done [#allocation6], 16384
    $region37: #{tpu_custom_call.1} parent=1 // pred_fallthru
      _
    // Predicated region
    $region38: #{tpu_custom_call.1} parent=1 // pred_check
      _
    $region39: #{tpu_custom_call.1} parent=1 // pred_check_branch
      %92 = sbr.rel (0) target = $region41
    $region40: #{tpu_custom_call.1} parent=1 // pred_region
      %94 = dma.done [#allocation6], 32
    $region41: #{tpu_custom_call.1} parent=1 // pred_fallthru
      _
    // Predicated region
    $region42: #{tpu_custom_call.1} parent=1 // pred_check
      _
    $region43: #{tpu_custom_call.1} parent=1 // pred_check_branch
      %96 = sbr.rel (0) target = $region45
    $region44: #{tpu_custom_call.1} parent=1 // pred_region
      %98 = dma.done [#allocation9], 4096
    $region45: #{tpu_custom_call.1} parent=1 // pred_fallthru
      _
    // Predicated region
    $region46: #{tpu_custom_call.1} parent=1 // pred_check
      _
    $region47: #{tpu_custom_call.1} parent=1 // pred_check_branch
      %100 = sbr.rel (0) target = $region49
    $region48: #{tpu_custom_call.1} parent=1 // pred_region
      %102 = dma.done [#allocation9], 2048
    $region49: #{tpu_custom_call.1} parent=1 // pred_fallthru
      _
    %v103 = vld [vmem:[#allocation2] sm:$0xff]
    %v104 = vld [vmem:[#allocation2 + $0x8] sm:$0xff]
    %v105 = vld [vmem:[#allocation2 + $0x10] sm:$0xff]
    %v106 = vld [vmem:[#allocation2 + $0x18] sm:$0xff]
    %v107 = vld [vmem:[#allocation2 + $0x20] sm:$0xff]
    %v108 = vld [vmem:[#allocation2 + $0x28] sm:$0xff]
    %v109 = vld [vmem:[#allocation2 + $0x30] sm:$0xff]
    %v110 = vld [vmem:[#allocation2 + $0x38] sm:$0xff]
    %v111 = vld [vmem:[#allocation2 + $0x40] sm:$0xff]
    %v112 = vld [vmem:[#allocation2 + $0x48] sm:$0xff]
    %v113 = vld [vmem:[#allocation2 + $0x50] sm:$0xff]
    %v114 = vld [vmem:[#allocation2 + $0x58] sm:$0xff]
    %v115 = vld [vmem:[#allocation2 + $0x60] sm:$0xff]
    %v116 = vld [vmem:[#allocation2 + $0x68] sm:$0xff]
    %v117 = vld [vmem:[#allocation2 + $0x70] sm:$0xff]
    %v118 = vld [vmem:[#allocation2 + $0x78] sm:$0xff]
    %v119 = vpack.c.bf16 %v111, %v103
    %v120 = vpack.c.bf16 %v112, %v104
    %v121 = vpack.c.bf16 %v113, %v105
    %v122 = vpack.c.bf16 %v114, %v106
    %v123 = vpack.c.bf16 %v115, %v107
    %v124 = vpack.c.bf16 %v116, %v108
    %v125 = vpack.c.bf16 %v117, %v109
    %v126 = vpack.c.bf16 %v118, %v110
    %v127 = vld [vmem:[#allocation5] sm:$0xff]
    %v128 = vld [vmem:[#allocation5 + $0x8] sm:$0xff]
    %v129 = vld [vmem:[#allocation5 + $0x10] sm:$0xff]
    %v130 = vld [vmem:[#allocation5 + $0x18] sm:$0xff]
    %v131 = vld [vmem:[#allocation5 + $0x20] sm:$0xff]
    %v132 = vld [vmem:[#allocation5 + $0x28] sm:$0xff]
    %v133 = vld [vmem:[#allocation5 + $0x30] sm:$0xff]
    %v134 = vld [vmem:[#allocation5 + $0x38] sm:$0xff]
    %v135 = vld [vmem:[#allocation5 + $0x40] sm:$0xff]
    %v136 = vld [vmem:[#allocation5 + $0x48] sm:$0xff]
    %v137 = vld [vmem:[#allocation5 + $0x50] sm:$0xff]
    %v138 = vld [vmem:[#allocation5 + $0x58] sm:$0xff]
    %v139 = vld [vmem:[#allocation5 + $0x60] sm:$0xff]
    %v140 = vld [vmem:[#allocation5 + $0x68] sm:$0xff]
    %v141 = vld [vmem:[#allocation5 + $0x70] sm:$0xff]
    %v142 = vld [vmem:[#allocation5 + $0x78] sm:$0xff]
    %v143 = vld [vmem:[#allocation5 + $0x80] sm:$0xff]
    %v144 = vld [vmem:[#allocation5 + $0x88] sm:$0xff]
    %v145 = vld [vmem:[#allocation5 + $0x90] sm:$0xff]
    %v146 = vld [vmem:[#allocation5 + $0x98] sm:$0xff]
    %v147 = vld [vmem:[#allocation5 + $0xa0] sm:$0xff]
    %v148 = vld [vmem:[#allocation5 + $0xa8] sm:$0xff]
    %v149 = vld [vmem:[#allocation5 + $0xb0] sm:$0xff]
    %v150 = vld [vmem:[#allocation5 + $0xb8] sm:$0xff]
    %v151 = vld [vmem:[#allocation5 + $0xc0] sm:$0xff]
    %v152 = vld [vmem:[#allocation5 + $0xc8] sm:$0xff]
    %v153 = vld [vmem:[#allocation5 + $0xd0] sm:$0xff]
    %v154 = vld [vmem:[#allocation5 + $0xd8] sm:$0xff]
    %v155 = vld [vmem:[#allocation5 + $0xe0] sm:$0xff]
    %v156 = vld [vmem:[#allocation5 + $0xe8] sm:$0xff]
    %v157 = vld [vmem:[#allocation5 + $0xf0] sm:$0xff]
    %v158 = vld [vmem:[#allocation5 + $0xf8] sm:$0xff]
    %v159 = vld [vmem:[#allocation5 + $0x100] sm:$0xff]
    %v160 = vld [vmem:[#allocation5 + $0x108] sm:$0xff]
    %v161 = vld [vmem:[#allocation5 + $0x110] sm:$0xff]
    %v162 = vld [vmem:[#allocation5 + $0x118] sm:$0xff]
    %v163 = vld [vmem:[#allocation5 + $0x120] sm:$0xff]
    %v164 = vld [vmem:[#allocation5 + $0x128] sm:$0xff]
    %v165 = vld [vmem:[#allocation5 + $0x130] sm:$0xff]
    %v166 = vld [vmem:[#allocation5 + $0x138] sm:$0xff]
    %v167 = vld [vmem:[#allocation5 + $0x140] sm:$0xff]
    %v168 = vld [vmem:[#allocation5 + $0x148] sm:$0xff]
    %v169 = vld [vmem:[#allocation5 + $0x150] sm:$0xff]
    %v170 = vld [vmem:[#allocation5 + $0x158] sm:$0xff]
    %v171 = vld [vmem:[#allocation5 + $0x160] sm:$0xff]
    %v172 = vld [vmem:[#allocation5 + $0x168] sm:$0xff]
    %v173 = vld [vmem:[#allocation5 + $0x170] sm:$0xff]
    %v174 = vld [vmem:[#allocation5 + $0x178] sm:$0xff]
    %v175 = vld [vmem:[#allocation5 + $0x180] sm:$0xff]
    %v176 = vld [vmem:[#allocation5 + $0x188] sm:$0xff]
    %v177 = vld [vmem:[#allocation5 + $0x190] sm:$0xff]
    %v178 = vld [vmem:[#allocation5 + $0x198] sm:$0xff]
    %v179 = vld [vmem:[#allocation5 + $0x1a0] sm:$0xff]
    %v180 = vld [vmem:[#allocation5 + $0x1a8] sm:$0xff]
    %v181 = vld [vmem:[#allocation5 + $0x1b0] sm:$0xff]
    %v182 = vld [vmem:[#allocation5 + $0x1b8] sm:$0xff]
    %v183 = vld [vmem:[#allocation5 + $0x1c0] sm:$0xff]
    %v184 = vld [vmem:[#allocation5 + $0x1c8] sm:$0xff]
    %v185 = vld [vmem:[#allocation5 + $0x1d0] sm:$0xff]
    %v186 = vld [vmem:[#allocation5 + $0x1d8] sm:$0xff]
    %v187 = vld [vmem:[#allocation5 + $0x1e0] sm:$0xff]
    %v188 = vld [vmem:[#allocation5 + $0x1e8] sm:$0xff]
    %v189 = vld [vmem:[#allocation5 + $0x1f0] sm:$0xff]
    %v190 = vld [vmem:[#allocation5 + $0x1f8] sm:$0xff]
    %v191 = vld [vmem:[#allocation5 + $0x200] sm:$0xff]
    %v192 = vld [vmem:[#allocation5 + $0x208] sm:$0xff]
    %v193 = vld [vmem:[#allocation5 + $0x210] sm:$0xff]
    %v194 = vld [vmem:[#allocation5 + $0x218] sm:$0xff]
    %v195 = vld [vmem:[#allocation5 + $0x220] sm:$0xff]
    %v196 = vld [vmem:[#allocation5 + $0x228] sm:$0xff]
    %v197 = vld [vmem:[#allocation5 + $0x230] sm:$0xff]
    %v198 = vld [vmem:[#allocation5 + $0x238] sm:$0xff]
    %v199 = vld [vmem:[#allocation5 + $0x240] sm:$0xff]
    %v200 = vld [vmem:[#allocation5 + $0x248] sm:$0xff]
    %v201 = vld [vmem:[#allocation5 + $0x250] sm:$0xff]
    %v202 = vld [vmem:[#allocation5 + $0x258] sm:$0xff]
    %v203 = vld [vmem:[#allocation5 + $0x260] sm:$0xff]
    %v204 = vld [vmem:[#allocation5 + $0x268] sm:$0xff]
    %v205 = vld [vmem:[#allocation5 + $0x270] sm:$0xff]
    %v206 = vld [vmem:[#allocation5 + $0x278] sm:$0xff]
    %v207 = vld [vmem:[#allocation5 + $0x280] sm:$0xff]
    %v208 = vld [vmem:[#allocation5 + $0x288] sm:$0xff]
    %v209 = vld [vmem:[#allocation5 + $0x290] sm:$0xff]
    %v210 = vld [vmem:[#allocation5 + $0x298] sm:$0xff]
    %v211 = vld [vmem:[#allocation5 + $0x2a0] sm:$0xff]
    %v212 = vld [vmem:[#allocation5 + $0x2a8] sm:$0xff]
    %v213 = vld [vmem:[#allocation5 + $0x2b0] sm:$0xff]
    %v214 = vld [vmem:[#allocation5 + $0x2b8] sm:$0xff]
    %v215 = vld [vmem:[#allocation5 + $0x2c0] sm:$0xff]
    %v216 = vld [vmem:[#allocation5 + $0x2c8] sm:$0xff]
    %v217 = vld [vmem:[#allocation5 + $0x2d0] sm:$0xff]
    %v218 = vld [vmem:[#allocation5 + $0x2d8] sm:$0xff]
    %v219 = vld [vmem:[#allocation5 + $0x2e0] sm:$0xff]
    %v220 = vld [vmem:[#allocation5 + $0x2e8] sm:$0xff]
    %v221 = vld [vmem:[#allocation5 + $0x2f0] sm:$0xff]
    %v222 = vld [vmem:[#allocation5 + $0x2f8] sm:$0xff]
    %v223 = vld [vmem:[#allocation5 + $0x300] sm:$0xff]
    %v224 = vld [vmem:[#allocation5 + $0x308] sm:$0xff]
    %v225 = vld [vmem:[#allocation5 + $0x310] sm:$0xff]
    %v226 = vld [vmem:[#allocation5 + $0x318] sm:$0xff]
    %v227 = vld [vmem:[#allocation5 + $0x320] sm:$0xff]
    %v228 = vld [vmem:[#allocation5 + $0x328] sm:$0xff]
    %v229 = vld [vmem:[#allocation5 + $0x330] sm:$0xff]
    %v230 = vld [vmem:[#allocation5 + $0x338] sm:$0xff]
    %v231 = vld [vmem:[#allocation5 + $0x340] sm:$0xff]
    %v232 = vld [vmem:[#allocation5 + $0x348] sm:$0xff]
    %v233 = vld [vmem:[#allocation5 + $0x350] sm:$0xff]
    %v234 = vld [vmem:[#allocation5 + $0x358] sm:$0xff]
    %v235 = vld [vmem:[#allocation5 + $0x360] sm:$0xff]
    %v236 = vld [vmem:[#allocation5 + $0x368] sm:$0xff]
    %v237 = vld [vmem:[#allocation5 + $0x370] sm:$0xff]
    %v238 = vld [vmem:[#allocation5 + $0x378] sm:$0xff]
    %v239 = vld [vmem:[#allocation5 + $0x380] sm:$0xff]
    %v240 = vld [vmem:[#allocation5 + $0x388] sm:$0xff]
    %v241 = vld [vmem:[#allocation5 + $0x390] sm:$0xff]
    %v242 = vld [vmem:[#allocation5 + $0x398] sm:$0xff]
    %v243 = vld [vmem:[#allocation5 + $0x3a0] sm:$0xff]
    %v244 = vld [vmem:[#allocation5 + $0x3a8] sm:$0xff]
    %v245 = vld [vmem:[#allocation5 + $0x3b0] sm:$0xff]
    %v246 = vld [vmem:[#allocation5 + $0x3b8] sm:$0xff]
    %v247 = vld [vmem:[#allocation5 + $0x3c0] sm:$0xff]
    %v248 = vld [vmem:[#allocation5 + $0x3c8] sm:$0xff]
    %v249 = vld [vmem:[#allocation5 + $0x3d0] sm:$0xff]
    %v250 = vld [vmem:[#allocation5 + $0x3d8] sm:$0xff]
    %v251 = vld [vmem:[#allocation5 + $0x3e0] sm:$0xff]
    %v252 = vld [vmem:[#allocation5 + $0x3e8] sm:$0xff]
    %v253 = vld [vmem:[#allocation5 + $0x3f0] sm:$0xff]
    %v254 = vld [vmem:[#allocation5 + $0x3f8] sm:$0xff]
    %v255 = vld [vmem:[#allocation7] sm:$0x3]
    %v257 = vperm.slane %v255, 0
    %v258 = vperm.slane %v255, 1
    %v389 = vunpack.c.l.b16 %v127
    %v390 = vunpack.c.h.b16 %v127
    %v391 = vunpack.c.l.b16 %v128
    %v392 = vunpack.c.h.b16 %v128
    %v393 = vunpack.c.l.b16 %v129
    %v394 = vunpack.c.h.b16 %v129
    %v395 = vunpack.c.l.b16 %v130
    %v396 = vunpack.c.h.b16 %v130
    %v397 = vunpack.c.l.b16 %v131
    %v398 = vunpack.c.h.b16 %v131
    %v399 = vunpack.c.l.b16 %v132
    %v400 = vunpack.c.h.b16 %v132
    %v401 = vunpack.c.l.b16 %v133
    %v402 = vunpack.c.h.b16 %v133
    %v403 = vunpack.c.l.b16 %v134
    %v404 = vunpack.c.h.b16 %v134
    %v405 = vunpack.c.l.b16 %v135
    %v406 = vunpack.c.h.b16 %v135
    %v407 = vunpack.c.l.b16 %v136
    %v408 = vunpack.c.h.b16 %v136
    %v409 = vunpack.c.l.b16 %v137
    %v410 = vunpack.c.h.b16 %v137
    %v411 = vunpack.c.l.b16 %v138
    %v412 = vunpack.c.h.b16 %v138
    %v413 = vunpack.c.l.b16 %v139
    %v414 = vunpack.c.h.b16 %v139
    %v415 = vunpack.c.l.b16 %v140
    %v416 = vunpack.c.h.b16 %v140
    %v417 = vunpack.c.l.b16 %v141
    %v418 = vunpack.c.h.b16 %v141
    %v419 = vunpack.c.l.b16 %v142
    %v420 = vunpack.c.h.b16 %v142
    %v421 = vunpack.c.l.b16 %v143
    %v422 = vunpack.c.h.b16 %v143
    %v423 = vunpack.c.l.b16 %v144
    %v424 = vunpack.c.h.b16 %v144
    %v425 = vunpack.c.l.b16 %v145
    %v426 = vunpack.c.h.b16 %v145
    %v427 = vunpack.c.l.b16 %v146
    %v428 = vunpack.c.h.b16 %v146
    %v429 = vunpack.c.l.b16 %v147
    %v430 = vunpack.c.h.b16 %v147
    %v431 = vunpack.c.l.b16 %v148
    %v432 = vunpack.c.h.b16 %v148
    %v433 = vunpack.c.l.b16 %v149
    %v434 = vunpack.c.h.b16 %v149
    %v435 = vunpack.c.l.b16 %v150
    %v436 = vunpack.c.h.b16 %v150
    %v437 = vunpack.c.l.b16 %v151
    %v438 = vunpack.c.h.b16 %v151
    %v439 = vunpack.c.l.b16 %v152
    %v440 = vunpack.c.h.b16 %v152
    %v441 = vunpack.c.l.b16 %v153
    %v442 = vunpack.c.h.b16 %v153
    %v443 = vunpack.c.l.b16 %v154
    %v444 = vunpack.c.h.b16 %v154
    %v445 = vunpack.c.l.b16 %v155
    %v446 = vunpack.c.h.b16 %v155
    %v447 = vunpack.c.l.b16 %v156
    %v448 = vunpack.c.h.b16 %v156
    %v449 = vunpack.c.l.b16 %v157
    %v450 = vunpack.c.h.b16 %v157
    %v451 = vunpack.c.l.b16 %v158
    %v452 = vunpack.c.h.b16 %v158
    %v453 = vunpack.c.l.b16 %v159
    %v454 = vunpack.c.h.b16 %v159
    %v455 = vunpack.c.l.b16 %v160
    %v456 = vunpack.c.h.b16 %v160
    %v457 = vunpack.c.l.b16 %v161
    %v458 = vunpack.c.h.b16 %v161
    %v459 = vunpack.c.l.b16 %v162
    %v460 = vunpack.c.h.b16 %v162
    %v461 = vunpack.c.l.b16 %v163
    %v462 = vunpack.c.h.b16 %v163
    %v463 = vunpack.c.l.b16 %v164
    %v464 = vunpack.c.h.b16 %v164
    %v465 = vunpack.c.l.b16 %v165
    %v466 = vunpack.c.h.b16 %v165
    %v467 = vunpack.c.l.b16 %v166
    %v468 = vunpack.c.h.b16 %v166
    %v469 = vunpack.c.l.b16 %v167
    %v470 = vunpack.c.h.b16 %v167
    %v471 = vunpack.c.l.b16 %v168
    %v472 = vunpack.c.h.b16 %v168
    %v473 = vunpack.c.l.b16 %v169
    %v474 = vunpack.c.h.b16 %v169
    %v475 = vunpack.c.l.b16 %v170
    %v476 = vunpack.c.h.b16 %v170
    %v477 = vunpack.c.l.b16 %v171
    %v478 = vunpack.c.h.b16 %v171
    %v479 = vunpack.c.l.b16 %v172
    %v480 = vunpack.c.h.b16 %v172
    %v481 = vunpack.c.l.b16 %v173
    %v482 = vunpack.c.h.b16 %v173
    %v483 = vunpack.c.l.b16 %v174
    %v484 = vunpack.c.h.b16 %v174
    %v485 = vunpack.c.l.b16 %v175
    %v486 = vunpack.c.h.b16 %v175
    %v487 = vunpack.c.l.b16 %v176
    %v488 = vunpack.c.h.b16 %v176
    %v489 = vunpack.c.l.b16 %v177
    %v490 = vunpack.c.h.b16 %v177
    %v491 = vunpack.c.l.b16 %v178
    %v492 = vunpack.c.h.b16 %v178
    %v493 = vunpack.c.l.b16 %v179
    %v494 = vunpack.c.h.b16 %v179
    %v495 = vunpack.c.l.b16 %v180
    %v496 = vunpack.c.h.b16 %v180
    %v497 = vunpack.c.l.b16 %v181
    %v498 = vunpack.c.h.b16 %v181
    %v499 = vunpack.c.l.b16 %v182
    %v500 = vunpack.c.h.b16 %v182
    %v501 = vunpack.c.l.b16 %v183
    %v502 = vunpack.c.h.b16 %v183
    %v503 = vunpack.c.l.b16 %v184
    %v504 = vunpack.c.h.b16 %v184
    %v505 = vunpack.c.l.b16 %v185
    %v506 = vunpack.c.h.b16 %v185
    %v507 = vunpack.c.l.b16 %v186
    %v508 = vunpack.c.h.b16 %v186
    %v509 = vunpack.c.l.b16 %v187
    %v510 = vunpack.c.h.b16 %v187
    %v511 = vunpack.c.l.b16 %v188
    %v512 = vunpack.c.h.b16 %v188
    %v513 = vunpack.c.l.b16 %v189
    %v514 = vunpack.c.h.b16 %v189
    %v515 = vunpack.c.l.b16 %v190
    %v516 = vunpack.c.h.b16 %v190
    %v517 = vunpack.c.l.b16 %v191
    %v518 = vunpack.c.h.b16 %v191
    %v519 = vunpack.c.l.b16 %v192
    %v520 = vunpack.c.h.b16 %v192
    %v521 = vunpack.c.l.b16 %v193
    %v522 = vunpack.c.h.b16 %v193
    %v523 = vunpack.c.l.b16 %v194
    %v524 = vunpack.c.h.b16 %v194
    %v525 = vunpack.c.l.b16 %v195
    %v526 = vunpack.c.h.b16 %v195
    %v527 = vunpack.c.l.b16 %v196
    %v528 = vunpack.c.h.b16 %v196
    %v529 = vunpack.c.l.b16 %v197
    %v530 = vunpack.c.h.b16 %v197
    %v531 = vunpack.c.l.b16 %v198
    %v532 = vunpack.c.h.b16 %v198
    %v533 = vunpack.c.l.b16 %v199
    %v534 = vunpack.c.h.b16 %v199
    %v535 = vunpack.c.l.b16 %v200
    %v536 = vunpack.c.h.b16 %v200
    %v537 = vunpack.c.l.b16 %v201
    %v538 = vunpack.c.h.b16 %v201
    %v539 = vunpack.c.l.b16 %v202
    %v540 = vunpack.c.h.b16 %v202
    %v541 = vunpack.c.l.b16 %v203
    %v542 = vunpack.c.h.b16 %v203
    %v543 = vunpack.c.l.b16 %v204
    %v544 = vunpack.c.h.b16 %v204
    %v545 = vunpack.c.l.b16 %v205
    %v546 = vunpack.c.h.b16 %v205
    %v547 = vunpack.c.l.b16 %v206
    %v548 = vunpack.c.h.b16 %v206
    %v549 = vunpack.c.l.b16 %v207
    %v550 = vunpack.c.h.b16 %v207
    %v551 = vunpack.c.l.b16 %v208
    %v552 = vunpack.c.h.b16 %v208
    %v553 = vunpack.c.l.b16 %v209
    %v554 = vunpack.c.h.b16 %v209
    %v555 = vunpack.c.l.b16 %v210
    %v556 = vunpack.c.h.b16 %v210
    %v557 = vunpack.c.l.b16 %v211
    %v558 = vunpack.c.h.b16 %v211
    %v559 = vunpack.c.l.b16 %v212
    %v560 = vunpack.c.h.b16 %v212
    %v561 = vunpack.c.l.b16 %v213
    %v562 = vunpack.c.h.b16 %v213
    %v563 = vunpack.c.l.b16 %v214
    %v564 = vunpack.c.h.b16 %v214
    %v565 = vunpack.c.l.b16 %v215
    %v566 = vunpack.c.h.b16 %v215
    %v567 = vunpack.c.l.b16 %v216
    %v568 = vunpack.c.h.b16 %v216
    %v569 = vunpack.c.l.b16 %v217
    %v570 = vunpack.c.h.b16 %v217
    %v571 = vunpack.c.l.b16 %v218
    %v572 = vunpack.c.h.b16 %v218
    %v573 = vunpack.c.l.b16 %v219
    %v574 = vunpack.c.h.b16 %v219
    %v575 = vunpack.c.l.b16 %v220
    %v576 = vunpack.c.h.b16 %v220
    %v577 = vunpack.c.l.b16 %v221
    %v578 = vunpack.c.h.b16 %v221
    %v579 = vunpack.c.l.b16 %v222
    %v580 = vunpack.c.h.b16 %v222
    %v581 = vunpack.c.l.b16 %v223
    %v582 = vunpack.c.h.b16 %v223
    %v583 = vunpack.c.l.b16 %v224
    %v584 = vunpack.c.h.b16 %v224
    %v585 = vunpack.c.l.b16 %v225
    %v586 = vunpack.c.h.b16 %v225
    %v587 = vunpack.c.l.b16 %v226
    %v588 = vunpack.c.h.b16 %v226
    %v589 = vunpack.c.l.b16 %v227
    %v590 = vunpack.c.h.b16 %v227
    %v591 = vunpack.c.l.b16 %v228
    %v592 = vunpack.c.h.b16 %v228
    %v593 = vunpack.c.l.b16 %v229
    %v594 = vunpack.c.h.b16 %v229
    %v595 = vunpack.c.l.b16 %v230
    %v596 = vunpack.c.h.b16 %v230
    %v597 = vunpack.c.l.b16 %v231
    %v598 = vunpack.c.h.b16 %v231
    %v599 = vunpack.c.l.b16 %v232
    %v600 = vunpack.c.h.b16 %v232
    %v601 = vunpack.c.l.b16 %v233
    %v602 = vunpack.c.h.b16 %v233
    %v603 = vunpack.c.l.b16 %v234
    %v604 = vunpack.c.h.b16 %v234
    %v605 = vunpack.c.l.b16 %v235
    %v606 = vunpack.c.h.b16 %v235
    %v607 = vunpack.c.l.b16 %v236
    %v608 = vunpack.c.h.b16 %v236
    %v609 = vunpack.c.l.b16 %v237
    %v610 = vunpack.c.h.b16 %v237
    %v611 = vunpack.c.l.b16 %v238
    %v612 = vunpack.c.h.b16 %v238
    %v613 = vunpack.c.l.b16 %v239
    %v614 = vunpack.c.h.b16 %v239
    %v615 = vunpack.c.l.b16 %v240
    %v616 = vunpack.c.h.b16 %v240
    %v617 = vunpack.c.l.b16 %v241
    %v618 = vunpack.c.h.b16 %v241
    %v619 = vunpack.c.l.b16 %v242
    %v620 = vunpack.c.h.b16 %v242
    %v621 = vunpack.c.l.b16 %v243
    %v622 = vunpack.c.h.b16 %v243
    %v623 = vunpack.c.l.b16 %v244
    %v624 = vunpack.c.h.b16 %v244
    %v625 = vunpack.c.l.b16 %v245
    %v626 = vunpack.c.h.b16 %v245
    %v627 = vunpack.c.l.b16 %v246
    %v628 = vunpack.c.h.b16 %v246
    %v629 = vunpack.c.l.b16 %v247
    %v630 = vunpack.c.h.b16 %v247
    %v631 = vunpack.c.l.b16 %v248
    %v632 = vunpack.c.h.b16 %v248
    %v633 = vunpack.c.l.b16 %v249
    %v634 = vunpack.c.h.b16 %v249
    %v635 = vunpack.c.l.b16 %v250
    %v636 = vunpack.c.h.b16 %v250
    %v637 = vunpack.c.l.b16 %v251
    %v638 = vunpack.c.h.b16 %v251
    %v639 = vunpack.c.l.b16 %v252
    %v640 = vunpack.c.h.b16 %v252
    %v641 = vunpack.c.l.b16 %v253
    %v642 = vunpack.c.h.b16 %v253
    %v643 = vunpack.c.l.b16 %v254
    %v644 = vunpack.c.h.b16 %v254
    %v645 = vpack.c.b16 %v391, %v389
    %v646 = vpack.c.b16 %v392, %v390
    %v647 = vpack.c.b16 %v395, %v393
    %v648 = vpack.c.b16 %v396, %v394
    %v649 = vpack.c.b16 %v399, %v397
    %v650 = vpack.c.b16 %v400, %v398
    %v651 = vpack.c.b16 %v403, %v401
    %v652 = vpack.c.b16 %v404, %v402
    %v653 = vpack.c.b16 %v407, %v405
    %v654 = vpack.c.b16 %v408, %v406
    %v655 = vpack.c.b16 %v411, %v409
    %v656 = vpack.c.b16 %v412, %v410
    %v657 = vpack.c.b16 %v415, %v413
    %v658 = vpack.c.b16 %v416, %v414
    %v659 = vpack.c.b16 %v419, %v417
    %v660 = vpack.c.b16 %v420, %v418
    %v661 = vpack.c.b16 %v423, %v421
    %v662 = vpack.c.b16 %v424, %v422
    %v663 = vpack.c.b16 %v427, %v425
    %v664 = vpack.c.b16 %v428, %v426
    %v665 = vpack.c.b16 %v431, %v429
    %v666 = vpack.c.b16 %v432, %v430
    %v667 = vpack.c.b16 %v435, %v433
    %v668 = vpack.c.b16 %v436, %v434
    %v669 = vpack.c.b16 %v439, %v437
    %v670 = vpack.c.b16 %v440, %v438
    %v671 = vpack.c.b16 %v443, %v441
    %v672 = vpack.c.b16 %v444, %v442
    %v673 = vpack.c.b16 %v447, %v445
    %v674 = vpack.c.b16 %v448, %v446
    %v675 = vpack.c.b16 %v451, %v449
    %v676 = vpack.c.b16 %v452, %v450
    %v677 = vpack.c.b16 %v455, %v453
    %v678 = vpack.c.b16 %v456, %v454
    %v679 = vpack.c.b16 %v459, %v457
    %v680 = vpack.c.b16 %v460, %v458
    %v681 = vpack.c.b16 %v463, %v461
    %v682 = vpack.c.b16 %v464, %v462
    %v683 = vpack.c.b16 %v467, %v465
    %v684 = vpack.c.b16 %v468, %v466
    %v685 = vpack.c.b16 %v471, %v469
    %v686 = vpack.c.b16 %v472, %v470
    %v687 = vpack.c.b16 %v475, %v473
    %v688 = vpack.c.b16 %v476, %v474
    %v689 = vpack.c.b16 %v479, %v477
    %v690 = vpack.c.b16 %v480, %v478
    %v691 = vpack.c.b16 %v483, %v481
    %v692 = vpack.c.b16 %v484, %v482
    %v693 = vpack.c.b16 %v487, %v485
    %v694 = vpack.c.b16 %v488, %v486
    %v695 = vpack.c.b16 %v491, %v489
    %v696 = vpack.c.b16 %v492, %v490
    %v697 = vpack.c.b16 %v495, %v493
    %v698 = vpack.c.b16 %v496, %v494
    %v699 = vpack.c.b16 %v499, %v497
    %v700 = vpack.c.b16 %v500, %v498
    %v701 = vpack.c.b16 %v503, %v501
    %v702 = vpack.c.b16 %v504, %v502
    %v703 = vpack.c.b16 %v507, %v505
    %v704 = vpack.c.b16 %v508, %v506
    %v705 = vpack.c.b16 %v511, %v509
    %v706 = vpack.c.b16 %v512, %v510
    %v707 = vpack.c.b16 %v515, %v513
    %v708 = vpack.c.b16 %v516, %v514
    %v709 = vpack.c.b16 %v519, %v517
    %v710 = vpack.c.b16 %v520, %v518
    %v711 = vpack.c.b16 %v523, %v521
    %v712 = vpack.c.b16 %v524, %v522
    %v713 = vpack.c.b16 %v527, %v525
    %v714 = vpack.c.b16 %v528, %v526
    %v715 = vpack.c.b16 %v531, %v529
    %v716 = vpack.c.b16 %v532, %v530
    %v717 = vpack.c.b16 %v535, %v533
    %v718 = vpack.c.b16 %v536, %v534
    %v719 = vpack.c.b16 %v539, %v537
    %v720 = vpack.c.b16 %v540, %v538
    %v721 = vpack.c.b16 %v543, %v541
    %v722 = vpack.c.b16 %v544, %v542
    %v723 = vpack.c.b16 %v547, %v545
    %v724 = vpack.c.b16 %v548, %v546
    %v725 = vpack.c.b16 %v551, %v549
    %v726 = vpack.c.b16 %v552, %v550
    %v727 = vpack.c.b16 %v555, %v553
    %v728 = vpack.c.b16 %v556, %v554
    %v729 = vpack.c.b16 %v559, %v557
    %v730 = vpack.c.b16 %v560, %v558
    %v731 = vpack.c.b16 %v563, %v561
    %v732 = vpack.c.b16 %v564, %v562
    %v733 = vpack.c.b16 %v567, %v565
    %v734 = vpack.c.b16 %v568, %v566
    %v735 = vpack.c.b16 %v571, %v569
    %v736 = vpack.c.b16 %v572, %v570
    %v737 = vpack.c.b16 %v575, %v573
    %v738 = vpack.c.b16 %v576, %v574
    %v739 = vpack.c.b16 %v579, %v577
    %v740 = vpack.c.b16 %v580, %v578
    %v741 = vpack.c.b16 %v583, %v581
    %v742 = vpack.c.b16 %v584, %v582
    %v743 = vpack.c.b16 %v587, %v585
    %v744 = vpack.c.b16 %v588, %v586
    %v745 = vpack.c.b16 %v591, %v589
    %v746 = vpack.c.b16 %v592, %v590
    %v747 = vpack.c.b16 %v595, %v593
    %v748 = vpack.c.b16 %v596, %v594
    %v749 = vpack.c.b16 %v599, %v597
    %v750 = vpack.c.b16 %v600, %v598
    %v751 = vpack.c.b16 %v603, %v601
    %v752 = vpack.c.b16 %v604, %v602
    %v753 = vpack.c.b16 %v607, %v605
    %v754 = vpack.c.b16 %v608, %v606
    %v755 = vpack.c.b16 %v611, %v609
    %v756 = vpack.c.b16 %v612, %v610
    %v757 = vpack.c.b16 %v615, %v613
    %v758 = vpack.c.b16 %v616, %v614
    %v759 = vpack.c.b16 %v619, %v617
    %v760 = vpack.c.b16 %v620, %v618
    %v761 = vpack.c.b16 %v623, %v621
    %v762 = vpack.c.b16 %v624, %v622
    %v763 = vpack.c.b16 %v627, %v625
    %v764 = vpack.c.b16 %v628, %v626
    %v765 = vpack.c.b16 %v631, %v629
    %v766 = vpack.c.b16 %v632, %v630
    %v767 = vpack.c.b16 %v635, %v633
    %v768 = vpack.c.b16 %v636, %v634
    %v769 = vpack.c.b16 %v639, %v637
    %v770 = vpack.c.b16 %v640, %v638
    %v771 = vpack.c.b16 %v643, %v641
    %v772 = vpack.c.b16 %v644, %v642
    %901 = vmatpush.bf16.msra.mxu0 %v659
    %902 = vmatpush.bf16.msra.mxu0 %v657
    %903 = vmatpush.bf16.msra.mxu0 %v655
    %904 = vmatpush.bf16.msra.mxu0 %v653
    %905 = vmatpush.bf16.msra.mxu0 %v651
    %906 = vmatpush.bf16.msra.mxu0 %v649
    %907 = vmatpush.bf16.msra.mxu0 %v647
    %908 = vmatpush.bf16.msra.mxu0 %v645
    %909 = vmatmul.bf16.gmra.mxu0 %v119
    %v910 = vpop.f32.mrf.mxu0
    %v911 = vadd.f32 %v257, %v910
    %v912 = vpop.f32.mrf.mxu0
    %v913 = vadd.f32 %v257, %v912
    %914 = vdwg.mxu0
    %915 = vmatpush.bf16.msra.mxu0 %v675
    %916 = vmatpush.bf16.msra.mxu0 %v673
    %917 = vmatpush.bf16.msra.mxu0 %v671
    %918 = vmatpush.bf16.msra.mxu0 %v669
    %919 = vmatpush.bf16.msra.mxu0 %v667
    %920 = vmatpush.bf16.msra.mxu0 %v665
    %921 = vmatpush.bf16.msra.mxu0 %v663
    %922 = vmatpush.bf16.msra.mxu0 %v661
    %923 = vmatmul.bf16.gmra.mxu0 %v120
    %v924 = vpop.f32.mrf.mxu0
    %v925 = vadd.f32 %v911, %v924
    %v926 = vpop.f32.mrf.mxu0
    %v927 = vadd.f32 %v913, %v926
    %928 = vdwg.mxu0
    %929 = vmatpush.bf16.msra.mxu0 %v691
    %930 = vmatpush.bf16.msra.mxu0 %v689
    %931 = vmatpush.bf16.msra.mxu0 %v687
    %932 = vmatpush.bf16.msra.mxu0 %v685
    %933 = vmatpush.bf16.msra.mxu0 %v683
    %934 = vmatpush.bf16.msra.mxu0 %v681
    %935 = vmatpush.bf16.msra.mxu0 %v679
    %936 = vmatpush.bf16.msra.mxu0 %v677
    %937 = vmatmul.bf16.gmra.mxu0 %v121
    %v938 = vpop.f32.mrf.mxu0
    %v939 = vadd.f32 %v925, %v938
    %v940 = vpop.f32.mrf.mxu0
    %v941 = vadd.f32 %v927, %v940
    %942 = vdwg.mxu0
    %943 = vmatpush.bf16.msra.mxu0 %v707
    %944 = vmatpush.bf16.msra.mxu0 %v705
    %945 = vmatpush.bf16.msra.mxu0 %v703
    %946 = vmatpush.bf16.msra.mxu0 %v701
    %947 = vmatpush.bf16.msra.mxu0 %v699
    %948 = vmatpush.bf16.msra.mxu0 %v697
    %949 = vmatpush.bf16.msra.mxu0 %v695
    %950 = vmatpush.bf16.msra.mxu0 %v693
    %951 = vmatmul.bf16.gmra.mxu0 %v122
    %v952 = vpop.f32.mrf.mxu0
    %v953 = vadd.f32 %v939, %v952
    %v954 = vpop.f32.mrf.mxu0
    %v955 = vadd.f32 %v941, %v954
    %956 = vdwg.mxu0
    %957 = vmatpush.bf16.msra.mxu0 %v723
    %958 = vmatpush.bf16.msra.mxu0 %v721
    %959 = vmatpush.bf16.msra.mxu0 %v719
    %960 = vmatpush.bf16.msra.mxu0 %v717
    %961 = vmatpush.bf16.msra.mxu0 %v715
    %962 = vmatpush.bf16.msra.mxu0 %v713
    %963 = vmatpush.bf16.msra.mxu0 %v711
    %964 = vmatpush.bf16.msra.mxu0 %v709
    %965 = vmatmul.bf16.gmra.mxu0 %v123
    %v966 = vpop.f32.mrf.mxu0
    %v967 = vadd.f32 %v953, %v966
    %v968 = vpop.f32.mrf.mxu0
    %v969 = vadd.f32 %v955, %v968
    %970 = vdwg.mxu0
    %971 = vmatpush.bf16.msra.mxu0 %v739
    %972 = vmatpush.bf16.msra.mxu0 %v737
    %973 = vmatpush.bf16.msra.mxu0 %v735
    %974 = vmatpush.bf16.msra.mxu0 %v733
    %975 = vmatpush.bf16.msra.mxu0 %v731
    %976 = vmatpush.bf16.msra.mxu0 %v729
    %977 = vmatpush.bf16.msra.mxu0 %v727
    %978 = vmatpush.bf16.msra.mxu0 %v725
    %979 = vmatmul.bf16.gmra.mxu0 %v124
    %v980 = vpop.f32.mrf.mxu0
    %v981 = vadd.f32 %v967, %v980
    %v982 = vpop.f32.mrf.mxu0
    %v983 = vadd.f32 %v969, %v982
    %984 = vdwg.mxu0
    %985 = vmatpush.bf16.msra.mxu0 %v755
    %986 = vmatpush.bf16.msra.mxu0 %v753
    %987 = vmatpush.bf16.msra.mxu0 %v751
    %988 = vmatpush.bf16.msra.mxu0 %v749
    %989 = vmatpush.bf16.msra.mxu0 %v747
    %990 = vmatpush.bf16.msra.mxu0 %v745
    %991 = vmatpush.bf16.msra.mxu0 %v743
    %992 = vmatpush.bf16.msra.mxu0 %v741
    %993 = vmatmul.bf16.gmra.mxu0 %v125
    %v994 = vpop.f32.mrf.mxu0
    %v995 = vadd.f32 %v981, %v994
    %v996 = vpop.f32.mrf.mxu0
    %v997 = vadd.f32 %v983, %v996
    %998 = vdwg.mxu0
    %999 = vmatpush.bf16.msra.mxu0 %v771
    %1000 = vmatpush.bf16.msra.mxu0 %v769
    %1001 = vmatpush.bf16.msra.mxu0 %v767
    %1002 = vmatpush.bf16.msra.mxu0 %v765
    %1003 = vmatpush.bf16.msra.mxu0 %v763
    %1004 = vmatpush.bf16.msra.mxu0 %v761
    %1005 = vmatpush.bf16.msra.mxu0 %v759
    %1006 = vmatpush.bf16.msra.mxu0 %v757
    %1007 = vmatmul.bf16.gmra.mxu0 %v126
    %v1008 = vpop.f32.mrf.mxu0
    %v1009 = vadd.f32 %v995, %v1008
    %v1010 = vpop.f32.mrf.mxu0
    %v1011 = vadd.f32 %v997, %v1010
    %1012 = vdwg.mxu0
    %1013 = vmatpush.bf16.msra.mxu0 %v660
    %1014 = vmatpush.bf16.msra.mxu0 %v658
    %1015 = vmatpush.bf16.msra.mxu0 %v656
    %1016 = vmatpush.bf16.msra.mxu0 %v654
    %1017 = vmatpush.bf16.msra.mxu0 %v652
    %1018 = vmatpush.bf16.msra.mxu0 %v650
    %1019 = vmatpush.bf16.msra.mxu0 %v648
    %1020 = vmatpush.bf16.msra.mxu0 %v646
    %1021 = vmatmul.bf16.gmra.mxu0 %v119
    %v1022 = vpop.f32.mrf.mxu0
    %v1023 = vadd.f32 %v258, %v1022
    %v1024 = vpop.f32.mrf.mxu0
    %v1025 = vadd.f32 %v258, %v1024
    %1026 = vdwg.mxu0
    %1027 = vmatpush.bf16.msra.mxu0 %v676
    %1028 = vmatpush.bf16.msra.mxu0 %v674
    %1029 = vmatpush.bf16.msra.mxu0 %v672
    %1030 = vmatpush.bf16.msra.mxu0 %v670
    %1031 = vmatpush.bf16.msra.mxu0 %v668
    %1032 = vmatpush.bf16.msra.mxu0 %v666
    %1033 = vmatpush.bf16.msra.mxu0 %v664
    %1034 = vmatpush.bf16.msra.mxu0 %v662
    %1035 = vmatmul.bf16.gmra.mxu0 %v120
    %v1036 = vpop.f32.mrf.mxu0
    %v1037 = vadd.f32 %v1023, %v1036
    %v1038 = vpop.f32.mrf.mxu0
    %v1039 = vadd.f32 %v1025, %v1038
    %1040 = vdwg.mxu0
    %1041 = vmatpush.bf16.msra.mxu0 %v692
    %1042 = vmatpush.bf16.msra.mxu0 %v690
    %1043 = vmatpush.bf16.msra.mxu0 %v688
    %1044 = vmatpush.bf16.msra.mxu0 %v686
    %1045 = vmatpush.bf16.msra.mxu0 %v684
    %1046 = vmatpush.bf16.msra.mxu0 %v682
    %1047 = vmatpush.bf16.msra.mxu0 %v680
    %1048 = vmatpush.bf16.msra.mxu0 %v678
    %1049 = vmatmul.bf16.gmra.mxu0 %v121
    %v1050 = vpop.f32.mrf.mxu0
    %v1051 = vadd.f32 %v1037, %v1050
    %v1052 = vpop.f32.mrf.mxu0
    %v1053 = vadd.f32 %v1039, %v1052
    %1054 = vdwg.mxu0
    %1055 = vmatpush.bf16.msra.mxu0 %v708
    %1056 = vmatpush.bf16.msra.mxu0 %v706
    %1057 = vmatpush.bf16.msra.mxu0 %v704
    %1058 = vmatpush.bf16.msra.mxu0 %v702
    %1059 = vmatpush.bf16.msra.mxu0 %v700
    %1060 = vmatpush.bf16.msra.mxu0 %v698
    %1061 = vmatpush.bf16.msra.mxu0 %v696
    %1062 = vmatpush.bf16.msra.mxu0 %v694
    %1063 = vmatmul.bf16.gmra.mxu0 %v122
    %v1064 = vpop.f32.mrf.mxu0
    %v1065 = vadd.f32 %v1051, %v1064
    %v1066 = vpop.f32.mrf.mxu0
    %v1067 = vadd.f32 %v1053, %v1066
    %1068 = vdwg.mxu0
    %1069 = vmatpush.bf16.msra.mxu0 %v724
    %1070 = vmatpush.bf16.msra.mxu0 %v722
    %1071 = vmatpush.bf16.msra.mxu0 %v720
    %1072 = vmatpush.bf16.msra.mxu0 %v718
    %1073 = vmatpush.bf16.msra.mxu0 %v716
    %1074 = vmatpush.bf16.msra.mxu0 %v714
    %1075 = vmatpush.bf16.msra.mxu0 %v712
    %1076 = vmatpush.bf16.msra.mxu0 %v710
    %1077 = vmatmul.bf16.gmra.mxu0 %v123
    %v1078 = vpop.f32.mrf.mxu0
    %v1079 = vadd.f32 %v1065, %v1078
    %v1080 = vpop.f32.mrf.mxu0
    %v1081 = vadd.f32 %v1067, %v1080
    %1082 = vdwg.mxu0
    %1083 = vmatpush.bf16.msra.mxu0 %v740
    %1084 = vmatpush.bf16.msra.mxu0 %v738
    %1085 = vmatpush.bf16.msra.mxu0 %v736
    %1086 = vmatpush.bf16.msra.mxu0 %v734
    %1087 = vmatpush.bf16.msra.mxu0 %v732
    %1088 = vmatpush.bf16.msra.mxu0 %v730
    %1089 = vmatpush.bf16.msra.mxu0 %v728
    %1090 = vmatpush.bf16.msra.mxu0 %v726
    %1091 = vmatmul.bf16.gmra.mxu0 %v124
    %v1092 = vpop.f32.mrf.mxu0
    %v1093 = vadd.f32 %v1079, %v1092
    %v1094 = vpop.f32.mrf.mxu0
    %v1095 = vadd.f32 %v1081, %v1094
    %1096 = vdwg.mxu0
    %1097 = vmatpush.bf16.msra.mxu0 %v756
    %1098 = vmatpush.bf16.msra.mxu0 %v754
    %1099 = vmatpush.bf16.msra.mxu0 %v752
    %1100 = vmatpush.bf16.msra.mxu0 %v750
    %1101 = vmatpush.bf16.msra.mxu0 %v748
    %1102 = vmatpush.bf16.msra.mxu0 %v746
    %1103 = vmatpush.bf16.msra.mxu0 %v744
    %1104 = vmatpush.bf16.msra.mxu0 %v742
    %1105 = vmatmul.bf16.gmra.mxu0 %v125
    %v1106 = vpop.f32.mrf.mxu0
    %v1107 = vadd.f32 %v1093, %v1106
    %v1108 = vpop.f32.mrf.mxu0
    %v1109 = vadd.f32 %v1095, %v1108
    %1110 = vdwg.mxu0
    %1111 = vmatpush.bf16.msra.mxu0 %v772
    %1112 = vmatpush.bf16.msra.mxu0 %v770
    %1113 = vmatpush.bf16.msra.mxu0 %v768
    %1114 = vmatpush.bf16.msra.mxu0 %v766
    %1115 = vmatpush.bf16.msra.mxu0 %v764
    %1116 = vmatpush.bf16.msra.mxu0 %v762
    %1117 = vmatpush.bf16.msra.mxu0 %v760
    %1118 = vmatpush.bf16.msra.mxu0 %v758
    %1119 = vmatmul.bf16.gmra.mxu0 %v126
    %v1120 = vpop.f32.mrf.mxu0
    %v1121 = vadd.f32 %v1107, %v1120
    %v1122 = vpop.f32.mrf.mxu0
    %v1123 = vadd.f32 %v1109, %v1122
    %1124 = vdwg.mxu0
    %v1125 = vmax.f32 %v1009, 0.0
    %v1126 = vmax.f32 %v1121, 0.0
    %v1127 = vmax.f32 %v1011, 0.0
    %v1128 = vmax.f32 %v1123, 0.0
    %v1129 = vpack.c.bf16 %v1127, %v1125
    %v1130 = vpack.c.bf16 %v1128, %v1126
    %v1131 = vld [vmem:[#allocation8] sm:$0xff]
    %v1132 = vld [vmem:[#allocation8 + $0x8] sm:$0xff]
    %v1133 = vld [vmem:[#allocation8 + $0x10] sm:$0xff]
    %v1134 = vld [vmem:[#allocation8 + $0x18] sm:$0xff]
    %v1135 = vld [vmem:[#allocation8 + $0x20] sm:$0xff]
    %v1136 = vld [vmem:[#allocation8 + $0x28] sm:$0xff]
    %v1137 = vld [vmem:[#allocation8 + $0x30] sm:$0xff]
    %v1138 = vld [vmem:[#allocation8 + $0x38] sm:$0xff]
    %v1139 = vld [vmem:[#allocation8 + $0x40] sm:$0xff]
    %v1140 = vld [vmem:[#allocation8 + $0x48] sm:$0xff]
    %v1141 = vld [vmem:[#allocation8 + $0x50] sm:$0xff]
    %v1142 = vld [vmem:[#allocation8 + $0x58] sm:$0xff]
    %v1143 = vld [vmem:[#allocation8 + $0x60] sm:$0xff]
    %v1144 = vld [vmem:[#allocation8 + $0x68] sm:$0xff]
    %v1145 = vld [vmem:[#allocation8 + $0x70] sm:$0xff]
    %v1146 = vld [vmem:[#allocation8 + $0x78] sm:$0xff]
    %v1147 = vld [vmem:[#allocation8 + $0x80] sm:$0xff]
    %v1148 = vld [vmem:[#allocation8 + $0x88] sm:$0xff]
    %v1149 = vld [vmem:[#allocation8 + $0x90] sm:$0xff]
    %v1150 = vld [vmem:[#allocation8 + $0x98] sm:$0xff]
    %v1151 = vld [vmem:[#allocation8 + $0xa0] sm:$0xff]
    %v1152 = vld [vmem:[#allocation8 + $0xa8] sm:$0xff]
    %v1153 = vld [vmem:[#allocation8 + $0xb0] sm:$0xff]
    %v1154 = vld [vmem:[#allocation8 + $0xb8] sm:$0xff]
    %v1155 = vld [vmem:[#allocation8 + $0xc0] sm:$0xff]
    %v1156 = vld [vmem:[#allocation8 + $0xc8] sm:$0xff]
    %v1157 = vld [vmem:[#allocation8 + $0xd0] sm:$0xff]
    %v1158 = vld [vmem:[#allocation8 + $0xd8] sm:$0xff]
    %v1159 = vld [vmem:[#allocation8 + $0xe0] sm:$0xff]
    %v1160 = vld [vmem:[#allocation8 + $0xe8] sm:$0xff]
    %v1161 = vld [vmem:[#allocation8 + $0xf0] sm:$0xff]
    %v1162 = vld [vmem:[#allocation8 + $0xf8] sm:$0xff]
    %v1163 = vld [vmem:[%s4] sm:$0x3]
    %v1165 = vperm.slane %v1163, 0
    %v1166 = vperm.slane %v1163, 1
    %v1201 = vunpack.c.l.b16 %v1131
    %v1202 = vunpack.c.h.b16 %v1131
    %v1203 = vunpack.c.l.b16 %v1132
    %v1204 = vunpack.c.h.b16 %v1132
    %v1205 = vunpack.c.l.b16 %v1133
    %v1206 = vunpack.c.h.b16 %v1133
    %v1207 = vunpack.c.l.b16 %v1134
    %v1208 = vunpack.c.h.b16 %v1134
    %v1209 = vunpack.c.l.b16 %v1135
    %v1210 = vunpack.c.h.b16 %v1135
    %v1211 = vunpack.c.l.b16 %v1136
    %v1212 = vunpack.c.h.b16 %v1136
    %v1213 = vunpack.c.l.b16 %v1137
    %v1214 = vunpack.c.h.b16 %v1137
    %v1215 = vunpack.c.l.b16 %v1138
    %v1216 = vunpack.c.h.b16 %v1138
    %v1217 = vunpack.c.l.b16 %v1139
    %v1218 = vunpack.c.h.b16 %v1139
    %v1219 = vunpack.c.l.b16 %v1140
    %v1220 = vunpack.c.h.b16 %v1140
    %v1221 = vunpack.c.l.b16 %v1141
    %v1222 = vunpack.c.h.b16 %v1141
    %v1223 = vunpack.c.l.b16 %v1142
    %v1224 = vunpack.c.h.b16 %v1142
    %v1225 = vunpack.c.l.b16 %v1143
    %v1226 = vunpack.c.h.b16 %v1143
    %v1227 = vunpack.c.l.b16 %v1144
    %v1228 = vunpack.c.h.b16 %v1144
    %v1229 = vunpack.c.l.b16 %v1145
    %v1230 = vunpack.c.h.b16 %v1145
    %v1231 = vunpack.c.l.b16 %v1146
    %v1232 = vunpack.c.h.b16 %v1146
    %v1233 = vunpack.c.l.b16 %v1147
    %v1234 = vunpack.c.h.b16 %v1147
    %v1235 = vunpack.c.l.b16 %v1148
    %v1236 = vunpack.c.h.b16 %v1148
    %v1237 = vunpack.c.l.b16 %v1149
    %v1238 = vunpack.c.h.b16 %v1149
    %v1239 = vunpack.c.l.b16 %v1150
    %v1240 = vunpack.c.h.b16 %v1150
    %v1241 = vunpack.c.l.b16 %v1151
    %v1242 = vunpack.c.h.b16 %v1151
    %v1243 = vunpack.c.l.b16 %v1152
    %v1244 = vunpack.c.h.b16 %v1152
    %v1245 = vunpack.c.l.b16 %v1153
    %v1246 = vunpack.c.h.b16 %v1153
    %v1247 = vunpack.c.l.b16 %v1154
    %v1248 = vunpack.c.h.b16 %v1154
    %v1249 = vunpack.c.l.b16 %v1155
    %v1250 = vunpack.c.h.b16 %v1155
    %v1251 = vunpack.c.l.b16 %v1156
    %v1252 = vunpack.c.h.b16 %v1156
    %v1253 = vunpack.c.l.b16 %v1157
    %v1254 = vunpack.c.h.b16 %v1157
    %v1255 = vunpack.c.l.b16 %v1158
    %v1256 = vunpack.c.h.b16 %v1158
    %v1257 = vunpack.c.l.b16 %v1159
    %v1258 = vunpack.c.h.b16 %v1159
    %v1259 = vunpack.c.l.b16 %v1160
    %v1260 = vunpack.c.h.b16 %v1160
    %v1261 = vunpack.c.l.b16 %v1161
    %v1262 = vunpack.c.h.b16 %v1161
    %v1263 = vunpack.c.l.b16 %v1162
    %v1264 = vunpack.c.h.b16 %v1162
    %v1265 = vpack.c.b16 %v1203, %v1201
    %v1266 = vpack.c.b16 %v1204, %v1202
    %v1267 = vpack.c.b16 %v1207, %v1205
    %v1268 = vpack.c.b16 %v1208, %v1206
    %v1269 = vpack.c.b16 %v1211, %v1209
    %v1270 = vpack.c.b16 %v1212, %v1210
    %v1271 = vpack.c.b16 %v1215, %v1213
    %v1272 = vpack.c.b16 %v1216, %v1214
    %v1273 = vpack.c.b16 %v1219, %v1217
    %v1274 = vpack.c.b16 %v1220, %v1218
    %v1275 = vpack.c.b16 %v1223, %v1221
    %v1276 = vpack.c.b16 %v1224, %v1222
    %v1277 = vpack.c.b16 %v1227, %v1225
    %v1278 = vpack.c.b16 %v1228, %v1226
    %v1279 = vpack.c.b16 %v1231, %v1229
    %v1280 = vpack.c.b16 %v1232, %v1230
    %v1281 = vpack.c.b16 %v1235, %v1233
    %v1282 = vpack.c.b16 %v1236, %v1234
    %v1283 = vpack.c.b16 %v1239, %v1237
    %v1284 = vpack.c.b16 %v1240, %v1238
    %v1285 = vpack.c.b16 %v1243, %v1241
    %v1286 = vpack.c.b16 %v1244, %v1242
    %v1287 = vpack.c.b16 %v1247, %v1245
    %v1288 = vpack.c.b16 %v1248, %v1246
    %v1289 = vpack.c.b16 %v1251, %v1249
    %v1290 = vpack.c.b16 %v1252, %v1250
    %v1291 = vpack.c.b16 %v1255, %v1253
    %v1292 = vpack.c.b16 %v1256, %v1254
    %v1293 = vpack.c.b16 %v1259, %v1257
    %v1294 = vpack.c.b16 %v1260, %v1258
    %v1295 = vpack.c.b16 %v1263, %v1261
    %v1296 = vpack.c.b16 %v1264, %v1262
    %1329 = vmatpush.bf16.msra.mxu0 %v1279
    %1330 = vmatpush.bf16.msra.mxu0 %v1277
    %1331 = vmatpush.bf16.msra.mxu0 %v1275
    %1332 = vmatpush.bf16.msra.mxu0 %v1273
    %1333 = vmatpush.bf16.msra.mxu0 %v1271
    %1334 = vmatpush.bf16.msra.mxu0 %v1269
    %1335 = vmatpush.bf16.msra.mxu0 %v1267
    %1336 = vmatpush.bf16.msra.mxu0 %v1265
    %1337 = vmatmul.bf16.gmra.mxu0 %v1129
    %v1338 = vpop.f32.mrf.mxu0
    %v1339 = vadd.f32 %v1165, %v1338
    %v1340 = vpop.f32.mrf.mxu0
    %v1341 = vadd.f32 %v1165, %v1340
    %1342 = vdwg.mxu0
    %1343 = vmatpush.bf16.msra.mxu0 %v1295
    %1344 = vmatpush.bf16.msra.mxu0 %v1293
    %1345 = vmatpush.bf16.msra.mxu0 %v1291
    %1346 = vmatpush.bf16.msra.mxu0 %v1289
    %1347 = vmatpush.bf16.msra.mxu0 %v1287
    %1348 = vmatpush.bf16.msra.mxu0 %v1285
    %1349 = vmatpush.bf16.msra.mxu0 %v1283
    %1350 = vmatpush.bf16.msra.mxu0 %v1281
    %1351 = vmatmul.bf16.gmra.mxu0 %v1130
    %v1352 = vpop.f32.mrf.mxu0
    %v1353 = vadd.f32 %v1339, %v1352
    %v1354 = vpop.f32.mrf.mxu0
    %v1355 = vadd.f32 %v1341, %v1354
    %1356 = vdwg.mxu0
    %1357 = vmatpush.bf16.msra.mxu0 %v1280
    %1358 = vmatpush.bf16.msra.mxu0 %v1278
    %1359 = vmatpush.bf16.msra.mxu0 %v1276
    %1360 = vmatpush.bf16.msra.mxu0 %v1274
    %1361 = vmatpush.bf16.msra.mxu0 %v1272
    %1362 = vmatpush.bf16.msra.mxu0 %v1270
    %1363 = vmatpush.bf16.msra.mxu0 %v1268
    %1364 = vmatpush.bf16.msra.mxu0 %v1266
    %1365 = vmatmul.bf16.gmra.mxu0 %v1129
    %v1366 = vpop.f32.mrf.mxu0
    %v1367 = vadd.f32 %v1166, %v1366
    %v1368 = vpop.f32.mrf.mxu0
    %v1369 = vadd.f32 %v1166, %v1368
    %1370 = vdwg.mxu0
    %1371 = vmatpush.bf16.msra.mxu0 %v1296
    %1372 = vmatpush.bf16.msra.mxu0 %v1294
    %1373 = vmatpush.bf16.msra.mxu0 %v1292
    %1374 = vmatpush.bf16.msra.mxu0 %v1290
    %1375 = vmatpush.bf16.msra.mxu0 %v1288
    %1376 = vmatpush.bf16.msra.mxu0 %v1286
    %1377 = vmatpush.bf16.msra.mxu0 %v1284
    %1378 = vmatpush.bf16.msra.mxu0 %v1282
    %1379 = vmatmul.bf16.gmra.mxu0 %v1130
    %v1380 = vpop.f32.mrf.mxu0
    %v1381 = vadd.f32 %v1367, %v1380
    %v1382 = vpop.f32.mrf.mxu0
    %v1383 = vadd.f32 %v1369, %v1382
    %1384 = vdwg.mxu0
    %v1385 = vmax.f32 %v1353, 0.0
    %v1386 = vmax.f32 %v1381, 0.0
    %v1387 = vmax.f32 %v1355, 0.0
    %v1388 = vmax.f32 %v1383, 0.0
    %v1389 = vpack.c.bf16 %v1387, %v1385
    %v1390 = vpack.c.bf16 %v1388, %v1386
    %v1391 = vld [vmem:[#allocation10] sm:$0xf]
    %v1392 = vld [vmem:[#allocation10 + $0x4] sm:$0xf]
    %v1393 = vld [vmem:[#allocation10 + $0x8] sm:$0xf]
    %v1394 = vld [vmem:[#allocation10 + $0xc] sm:$0xf]
    %v1395 = vld [vmem:[#allocation10 + $0x10] sm:$0xf]
    %v1396 = vld [vmem:[#allocation10 + $0x14] sm:$0xf]
    %v1397 = vld [vmem:[#allocation10 + $0x18] sm:$0xf]
    %v1398 = vld [vmem:[#allocation10 + $0x1c] sm:$0xf]
    %v1399 = vld [vmem:[#allocation10 + $0x20] sm:$0xf]
    %v1400 = vld [vmem:[#allocation10 + $0x24] sm:$0xf]
    %v1401 = vld [vmem:[#allocation10 + $0x28] sm:$0xf]
    %v1402 = vld [vmem:[#allocation10 + $0x2c] sm:$0xf]
    %v1403 = vld [vmem:[#allocation10 + $0x30] sm:$0xf]
    %v1404 = vld [vmem:[#allocation10 + $0x34] sm:$0xf]
    %v1405 = vld [vmem:[#allocation10 + $0x38] sm:$0xf]
    %v1406 = vld [vmem:[#allocation10 + $0x3c] sm:$0xf]
    %v1407 = vld [vmem:[#allocation10 + $0x40] sm:$0xf]
    %v1408 = vld [vmem:[#allocation10 + $0x44] sm:$0xf]
    %v1409 = vld [vmem:[#allocation10 + $0x48] sm:$0xf]
    %v1410 = vld [vmem:[#allocation10 + $0x4c] sm:$0xf]
    %v1411 = vld [vmem:[#allocation10 + $0x50] sm:$0xf]
    %v1412 = vld [vmem:[#allocation10 + $0x54] sm:$0xf]
    %v1413 = vld [vmem:[#allocation10 + $0x58] sm:$0xf]
    %v1414 = vld [vmem:[#allocation10 + $0x5c] sm:$0xf]
    %v1415 = vld [vmem:[#allocation10 + $0x60] sm:$0xf]
    %v1416 = vld [vmem:[#allocation10 + $0x64] sm:$0xf]
    %v1417 = vld [vmem:[#allocation10 + $0x68] sm:$0xf]
    %v1418 = vld [vmem:[#allocation10 + $0x6c] sm:$0xf]
    %v1419 = vld [vmem:[#allocation10 + $0x70] sm:$0xf]
    %v1420 = vld [vmem:[#allocation10 + $0x74] sm:$0xf]
    %v1421 = vld [vmem:[#allocation10 + $0x78] sm:$0xf]
    %v1422 = vld [vmem:[#allocation10 + $0x7c] sm:$0xf]
    %v1423 = vld [vmem:[%s6] sm:$0x1]
    %v1425 = vperm.slane %v1423, 0
    %v1459 = vunpack.c.l.b16 %v1391
    %v1460 = vunpack.c.l.b16 %v1392
    %v1461 = vunpack.c.l.b16 %v1393
    %v1462 = vunpack.c.l.b16 %v1394
    %v1463 = vunpack.c.l.b16 %v1395
    %v1464 = vunpack.c.l.b16 %v1396
    %v1465 = vunpack.c.l.b16 %v1397
    %v1466 = vunpack.c.l.b16 %v1398
    %v1467 = vunpack.c.l.b16 %v1399
    %v1468 = vunpack.c.l.b16 %v1400
    %v1469 = vunpack.c.l.b16 %v1401
    %v1470 = vunpack.c.l.b16 %v1402
    %v1471 = vunpack.c.l.b16 %v1403
    %v1472 = vunpack.c.l.b16 %v1404
    %v1473 = vunpack.c.l.b16 %v1405
    %v1474 = vunpack.c.l.b16 %v1406
    %v1475 = vunpack.c.l.b16 %v1407
    %v1476 = vunpack.c.l.b16 %v1408
    %v1477 = vunpack.c.l.b16 %v1409
    %v1478 = vunpack.c.l.b16 %v1410
    %v1479 = vunpack.c.l.b16 %v1411
    %v1480 = vunpack.c.l.b16 %v1412
    %v1481 = vunpack.c.l.b16 %v1413
    %v1482 = vunpack.c.l.b16 %v1414
    %v1483 = vunpack.c.l.b16 %v1415
    %v1484 = vunpack.c.l.b16 %v1416
    %v1485 = vunpack.c.l.b16 %v1417
    %v1486 = vunpack.c.l.b16 %v1418
    %v1487 = vunpack.c.l.b16 %v1419
    %v1488 = vunpack.c.l.b16 %v1420
    %v1489 = vunpack.c.l.b16 %v1421
    %v1490 = vunpack.c.l.b16 %v1422
    %v1491 = vpack.c.b16 %v1460, %v1459
    %v1492 = vpack.c.b16 %v1462, %v1461
    %v1493 = vpack.c.b16 %v1464, %v1463
    %v1494 = vpack.c.b16 %v1466, %v1465
    %v1495 = vpack.c.b16 %v1468, %v1467
    %v1496 = vpack.c.b16 %v1470, %v1469
    %v1497 = vpack.c.b16 %v1472, %v1471
    %v1498 = vpack.c.b16 %v1474, %v1473
    %v1499 = vpack.c.b16 %v1476, %v1475
    %v1500 = vpack.c.b16 %v1478, %v1477
    %v1501 = vpack.c.b16 %v1480, %v1479
    %v1502 = vpack.c.b16 %v1482, %v1481
    %v1503 = vpack.c.b16 %v1484, %v1483
    %v1504 = vpack.c.b16 %v1486, %v1485
    %v1505 = vpack.c.b16 %v1488, %v1487
    %v1506 = vpack.c.b16 %v1490, %v1489
    %1523 = vmatpush.bf16.msra.mxu0 %v1498
    %1524 = vmatpush.bf16.msra.mxu0 %v1497
    %1525 = vmatpush.bf16.msra.mxu0 %v1496
    %1526 = vmatpush.bf16.msra.mxu0 %v1495
    %1527 = vmatpush.bf16.msra.mxu0 %v1494
    %1528 = vmatpush.bf16.msra.mxu0 %v1493
    %1529 = vmatpush.bf16.msra.mxu0 %v1492
    %1530 = vmatpush.bf16.msra.mxu0 %v1491
    %1531 = vmatmul.bf16.gmra.mxu0 %v1389
    %v1532 = vpop.f32.mrf.mxu0
    %v1533 = vadd.f32 %v1425, %v1532
    %v1534 = vpop.f32.mrf.mxu0
    %v1535 = vadd.f32 %v1425, %v1534
    %1536 = vdwg.mxu0
    %1537 = vmatpush.bf16.msra.mxu0 %v1506
    %1538 = vmatpush.bf16.msra.mxu0 %v1505
    %1539 = vmatpush.bf16.msra.mxu0 %v1504
    %1540 = vmatpush.bf16.msra.mxu0 %v1503
    %1541 = vmatpush.bf16.msra.mxu0 %v1502
    %1542 = vmatpush.bf16.msra.mxu0 %v1501
    %1543 = vmatpush.bf16.msra.mxu0 %v1500
    %1544 = vmatpush.bf16.msra.mxu0 %v1499
    %1545 = vmatmul.bf16.gmra.mxu0 %v1390
    %v1546 = vpop.f32.mrf.mxu0
    %v1547 = vadd.f32 %v1533, %v1546
    %v1548 = vpop.f32.mrf.mxu0
    %v1549 = vadd.f32 %v1535, %v1548
    %1550 = vdwg.mxu0
    %v1551 = vxor.u32 %v1547, 2147483648
    %v1552 = vxor.u32 %v1549, 2147483648
    %v1553 = vmul.f32 %v1551, 1.442695
    %v1554 = vpow.pop %v1553
    %v1555 = vmul.f32 %v1552, 1.442695
    %v1556 = vpow.pop %v1555
    %v1557 = vadd.f32 %v1554, 1.0
    %v1558 = vadd.f32 %v1556, 1.0
    %v1559 = vrcp.pop %v1557
    %v1560 = vmul.f32 %v1557, %v1559
    %v1561 = vsub.f32 1.0, %v1560
    %v1562 = vmul.f32 %v1559, %v1561
    %v1563 = vadd.f32 %v1559, %v1562
    %vm1564 = vweird.f32 %v1557
    %vm1565 = vweird.f32 %v1559
    %vm1566 = vmor %vm1564, %vm1565
    %v1567 = vsel %vm1566, %v1559, %v1563
    %v1568 = vand.u32 2147483647, %v1557
    %vm1569 = vcmp.eq.f32.partialorder %v1568, 8.507059e+37
    %v1570 = vand.u32 %v1557, 2147483648
    %v1571 = vor.u32 1.1754944e-38, %v1570
    %v1572 = vsel %vm1569, %v1571, %v1567
    %v1573 = vmul.f32 1.0, %v1572
    %v1574 = vrcp.pop %v1558
    %v1575 = vmul.f32 %v1558, %v1574
    %v1576 = vsub.f32 1.0, %v1575
    %v1577 = vmul.f32 %v1574, %v1576
    %v1578 = vadd.f32 %v1574, %v1577
    %vm1579 = vweird.f32 %v1558
    %vm1580 = vweird.f32 %v1574
    %vm1581 = vmor %vm1579, %vm1580
    %v1582 = vsel %vm1581, %v1574, %v1578
    %v1583 = vand.u32 2147483647, %v1558
    %vm1584 = vcmp.eq.f32.partialorder %v1583, 8.507059e+37
    %v1585 = vand.u32 %v1558, 2147483648
    %v1586 = vor.u32 1.1754944e-38, %v1585
    %v1587 = vsel %vm1584, %v1586, %v1582
    %v1588 = vmul.f32 1.0, %v1587
    %1589 = vst [vmem:[#allocation11] sm:$0xff] %v1573
    %1590 = vst [vmem:[#allocation11 + $0x8] sm:$0xff] %v1588
    // Predicated region
    $region50: #{tpu_custom_call.1} parent=1 // pred_check
      _
    $region51: #{tpu_custom_call.1} parent=1 // pred_check_branch
      %1592 = sbr.rel (0) target = $region53
    $region52: #{tpu_custom_call.1} parent=1 // pred_region
      %1594 = vsyncadd [#allocation4], 0
      %s1595 = sshll.u32 [#allocation11], 4
      %s1596 = int_to_ptr.vmem [resolvable:$true] %s1595
      %s1597 = sshll.u32 %s7, 4
      %s1598 = int_to_ptr.hbm [resolvable:$true] %s1597
      %1603 = dma.vmem_to_hbm [thread:$0]  %s1596, 256, %s1598, [#allocation4], 128, 128, 8
    $region53: #{tpu_custom_call.1} parent=1 // pred_fallthru
      _
    // Predicated region
    $region54: #{tpu_custom_call.1} parent=1 // pred_check
      _
    $region55: #{tpu_custom_call.1} parent=1 // pred_check_branch
      %1605 = sbr.rel (0) target = $region57
    $region56: #{tpu_custom_call.1} parent=1 // pred_region
      %1607 = dma.done [#allocation4], 256
    $region57: #{tpu_custom_call.1} parent=1 // pred_fallthru
      _
    %1608 = vsyncpa [#allocation3], 1
    %1609 = vsyncpa [#allocation6], 1
    %1610 = vsyncpa [#allocation9], 1
    %1611 = vsyncpa [#allocation4], 1

</llo_original>
